<compile_context>
chip_gen: v7x
topology: tpu7x:2x2x1
jax: 0.10.0
libtpu: 0.0.40
codegen_flags: <defaults>
</compile_context>

<pallas_src>
import functools

import jax
import jax.numpy as jnp
from jax.experimental import pallas as pl
from jax.experimental.pallas import tpu as pltpu

LANE = 128      # vreg lane width (batch axis)
SUBLANE = 8     # f32 sublane granularity (feature / hidden / action axes)


def _round_up(x, m):
    return (x + m - 1) // m * m


# ---------------------------------------------------------------------------
# Kernel: one batch tile (batch on lanes) of the full transposed 3-layer MLP.
#   x_ref  : (s_pad, tb)        compute dtype (f32 or bf16)
#   wN_ref : (out_pad, in_pad)  compute dtype, grid-invariant (VMEM resident)
#   bN_ref : (out_pad, 1)       f32 column biases, grid-invariant
#   o_ref  : (a_pad, tb)        f32, lane-dense output block
# Matmuls accumulate in f32; bias-add / tanh run in f32 on real sublanes only.
# TODO(synk): for strictly-f32 MXU passes add precision=jax.lax.Precision.HIGHEST
#             to the dots (left at default here; accuracy is validated below).
# ---------------------------------------------------------------------------
def _critic_kernel(x_ref, w1_ref, b1_ref, w2_ref, b2_ref, w3_ref, b3_ref,
                   o_ref):
    x = x_ref[...]                                            # (s_pad, tb)
    h1 = jnp.dot(w1_ref[...], x, preferred_element_type=jnp.float32)
    h1 = jnp.tanh(h1 + b1_ref[...]).astype(x.dtype)           # (h_pad, tb)
    h2 = jnp.dot(w2_ref[...], h1, preferred_element_type=jnp.float32)
    h2 = jnp.tanh(h2 + b2_ref[...]).astype(x.dtype)           # (h_pad, tb)
    y = jnp.dot(w3_ref[...], h2, preferred_element_type=jnp.float32)
    o_ref[...] = y + b3_ref[...]                              # (a_pad, tb)


# ---------------------------------------------------------------------------
# Offline parameter packing: weights transposed to (out, in) and zero-padded
# to sublane granularity; biases become f32 column vectors (out_pad, 1).
# Use param_dtype=jnp.bfloat16 on v6e/v7x for native MXU rate (biases stay f32).
# ---------------------------------------------------------------------------
def pack_critic_params(params, param_dtype=jnp.float32):
    w1, b1, w2, b2, w3, b3 = params                # w: (in, out), b: (1, out)
    n_states, hidden = w1.shape
    n_actions = w3.shape[1]
    gran = SUBLANE if jnp.dtype(param_dtype).itemsize == 4 else 2 * SUBLANE
    s_pad = _round_up(n_states, gran)
    h_pad = _round_up(hidden, gran)
    a_pad = _round_up(n_actions, SUBLANE)

    def w_t(w, rows, cols):
        wt = jnp.asarray(w, jnp.float32).T          # (out, in)
        wt = jnp.pad(wt, ((0, rows - wt.shape[0]), (0, cols - wt.shape[1])))
        return wt.astype(param_dtype)

    def b_col(b, rows):
        bc = jnp.asarray(b, jnp.float32).reshape(-1, 1)
        return jnp.pad(bc, ((0, rows - bc.shape[0]), (0, 0)))

    return (w_t(w1, h_pad, s_pad), b_col(b1, h_pad),
            w_t(w2, h_pad, h_pad), b_col(b2, h_pad),
            w_t(w3, a_pad, h_pad), b_col(b3, a_pad))


def _choose_batch_tile(batch, block_batch):
    """Batch tile on lanes: >=2 grid steps when the batch allows it (v7x
    megacore) and the tile re-fit to the batch to limit tail-padding waste."""
    b_ceil = _round_up(batch, LANE)
    tb = min(_round_up(block_batch, LANE), b_ceil)
    if b_ceil >= 2 * LANE:
        tb = min(tb, _round_up(pl.cdiv(b_ceil, 2), LANE))
    n_tiles = pl.cdiv(b_ceil, tb)
    tb = _round_up(pl.cdiv(b_ceil, n_tiles), LANE)
    return tb, n_tiles


# ---------------------------------------------------------------------------
# Wrapper: batch grid (batch on lanes), resident weights, small padded output.
# ---------------------------------------------------------------------------
@functools.partial(jax.jit, static_argnames=("n_actions", "block_batch"))
def critic_forward(x, packed_params, *, n_actions, block_batch=2048):
    w1t, b1c, w2t, b2c, w3t, b3c = packed_params
    batch, n_states = x.shape
    h_pad, s_pad = w1t.shape
    a_pad = w3t.shape[0]
    assert n_states <= s_pad and n_actions <= a_pad
    compute_dtype = w1t.dtype

    tb, n_tiles = _choose_batch_tile(batch, block_batch)
    b_pad = n_tiles * tb

    # Single fused transpose + pad (+ optional cast): (batch, S) -> (s_pad, b_pad).
    x_t = jnp.pad(x.astype(compute_dtype).T,
                  ((0, s_pad - n_states), (0, b_pad - batch)))

    flops = 2 * b_pad * (s_pad * h_pad + h_pad * h_pad + h_pad * a_pad)
    bytes_accessed = (
        x_t.size * x_t.dtype.itemsize
        + sum(int(a.size) * a.dtype.itemsize for a in packed_params)
        + a_pad * b_pad * 4)
    cost = pl.CostEstimate(flops=flops,
                           transcendentals=2 * b_pad * h_pad,
                           bytes_accessed=bytes_accessed)

    resident = lambda i: (0, 0)   # grid-invariant: DMA'd once, stays in VMEM

    out_t = pl.pallas_call(
        _critic_kernel,
        out_shape=jax.ShapeDtypeStruct((a_pad, b_pad), jnp.float32),
        grid=(n_tiles,),
        in_specs=[
            pl.BlockSpec((s_pad, tb), lambda i: (0, i)),   # x tile: batch on lanes
            pl.BlockSpec(w1t.shape, resident),
            pl.BlockSpec(b1c.shape, resident),
            pl.BlockSpec(w2t.shape, resident),
            pl.BlockSpec(b2c.shape, resident),
            pl.BlockSpec(w3t.shape, resident),
            pl.BlockSpec(b3c.shape, resident),
        ],
        out_specs=pl.BlockSpec((a_pad, tb), lambda i: (0, i)),
        compiler_params=pltpu.CompilerParams(
            dimension_semantics=("parallel",)),            # shard batch on v7x
        cost_estimate=cost,
    )(x_t, w1t, b1c, w2t, b2c, w3t, b3c)

    # Small follow-up slice over an (a_pad, b_pad) slab (~16x smaller than the
    # previous 128-lane-padded layout); result is (batch, n_actions).
    return out_t[:n_actions, :batch].T


# ---------------------------------------------------------------------------
# Init matching PyTorch nn.Linear default: U(-1/sqrt(fan_in), 1/sqrt(fan_in)).
# Weights stored (in_features, out_features) so the forward is x @ W + b.
# ---------------------------------------------------------------------------
def init_critic_params(key, n_states, n_actions, hidden_dim):
    def linear(k, fan_in, fan_out):
        kw, kb = jax.random.split(k)
        bound = 1.0 / jnp.sqrt(jnp.float32(fan_in))
        w = jax.random.uniform(kw, (fan_in, fan_out), jnp.float32, -bound, bound)
        b = jax.random.uniform(kb, (1, fan_out), jnp.float32, -bound, bound)
        return w, b

    k1, k2, k3 = jax.random.split(key, 3)
    w1, b1 = linear(k1, n_states, hidden_dim)
    w2, b2 = linear(k2, hidden_dim, hidden_dim)
    w3, b3 = linear(k3, hidden_dim, n_actions)
    return (w1, b1, w2, b2, w3, b3)


def critic_reference(x, params, dot_dtype=None):
    """Pure-JAX reference (HIGHEST precision).  dot_dtype=bf16 emulates a
    bf16-input MXU pass and is only used to calibrate the check tolerance."""
    w1, b1, w2, b2, w3, b3 = params
    hp = jax.lax.Precision.HIGHEST

    def dot(a, b):
        if dot_dtype is not None:
            a, b = a.astype(dot_dtype), b.astype(dot_dtype)
        return jnp.dot(a, b, precision=hp, preferred_element_type=jnp.float32)

    h = jnp.tanh(dot(x, w1) + b1)
    h = jnp.tanh(dot(h, w2) + b2)
    return dot(h, w3) + b3


if __name__ == "__main__":
    n_states, n_actions, hidden_dim = 16, 4, 32

    key = jax.random.PRNGKey(0)
    kx, kp, kx2 = jax.random.split(key, 3)
    params = init_critic_params(kp, n_states, n_actions, hidden_dim)
    packed = pack_critic_params(params)   # param_dtype=jnp.bfloat16 on v6e/v7x

    def check(x):
        out = jax.block_until_ready(
            critic_forward(x, packed, n_actions=n_actions))
        ref = critic_reference(x, params)
        assert out.shape == ref.shape, (out.shape, ref.shape)
        # Tolerance calibrated against a bf16-input MXU pass, in case the
        # backend's default f32 matmul path truncates inputs to bf16.
        ref_lo = critic_reference(x, params, dot_dtype=jnp.bfloat16)
        tol = max(1e-4, 4.0 * float(jnp.max(jnp.abs(ref - ref_lo))))
        err = float(jnp.max(jnp.abs(out - ref)))
        assert err <= tol, (err, tol)

    # Small batch: single grid step (single batch tile of 128 lanes).
    check(jax.random.normal(kx, (8, n_states), jnp.float32))
    # Larger ragged batch: >=2 grid steps (megacore path) + tail padding.
    check(jax.random.normal(kx2, (300, n_states), jnp.float32))

    print("KERNEL_OK")
</pallas_src>

<mosaic_0001>
module attributes {stable_mosaic.version = 11 : i64} {
  func.func @_critic_kernel(%arg0: i32, %arg1: memref<16x128xf32, #tpu.memory_space<vmem>>, %arg2: memref<32x16xf32, #tpu.memory_space<vmem>>, %arg3: memref<32x1xf32, #tpu.memory_space<vmem>>, %arg4: memref<32x32xf32, #tpu.memory_space<vmem>>, %arg5: memref<32x1xf32, #tpu.memory_space<vmem>>, %arg6: memref<8x32xf32, #tpu.memory_space<vmem>>, %arg7: memref<8x1xf32, #tpu.memory_space<vmem>>, %arg8: memref<8x128xf32, #tpu.memory_space<vmem>>) attributes {dimension_semantics = [#tpu.dimension_semantics<parallel>], iteration_bounds = array<i64: 1>, scalar_prefetch = 0 : i64, scratch_operands = 0 : i64, tpu.core_type = #tpu.core_type<tc>, window_params = [{transform_indices = @transform_0, window_bounds = array<i64: 16, 128>}, {pipeline_mode = #tpu.pipeline_mode<synchronous>, transform_indices = @transform_1, window_bounds = array<i64: 32, 16>}, {pipeline_mode = #tpu.pipeline_mode<synchronous>, transform_indices = @transform_2, window_bounds = array<i64: 32, 1>}, {pipeline_mode = #tpu.pipeline_mode<synchronous>, transform_indices = @transform_3, window_bounds = array<i64: 32, 32>}, {pipeline_mode = #tpu.pipeline_mode<synchronous>, transform_indices = @transform_4, window_bounds = array<i64: 32, 1>}, {pipeline_mode = #tpu.pipeline_mode<synchronous>, transform_indices = @transform_5, window_bounds = array<i64: 8, 32>}, {pipeline_mode = #tpu.pipeline_mode<synchronous>, transform_indices = @transform_6, window_bounds = array<i64: 8, 1>}, {transform_indices = @transform_7, window_bounds = array<i64: 8, 128>}]} {
    %c0 = arith.constant 0 : index
    %c0_0 = arith.constant 0 : index
    %0 = vector.load %arg1[%c0, %c0_0] : memref<16x128xf32, #tpu.memory_space<vmem>>, vector<16x128xf32>
    %c0_1 = arith.constant 0 : index
    %c0_2 = arith.constant 0 : index
    %1 = vector.load %arg2[%c0_1, %c0_2] : memref<32x16xf32, #tpu.memory_space<vmem>>, vector<32x16xf32>
    %cst = arith.constant dense<0.000000e+00> : vector<32x128xf32>
    %2 = tpu.matmul %1, %0, %cst {dimension_numbers = #tpu.dot_dimension_numbers<[1], [0], [0], [1], [0, 0, 1, 1], [], []>} : vector<32x16xf32>, vector<16x128xf32>, vector<32x128xf32> -> vector<32x128xf32>
    %c0_3 = arith.constant 0 : index
    %c0_4 = arith.constant 0 : index
    %3 = vector.load %arg3[%c0_3, %c0_4] : memref<32x1xf32, #tpu.memory_space<vmem>>, vector<32x1xf32>
    %4 = vector.broadcast %3 : vector<32x1xf32> to vector<32x128xf32>
    %5 = arith.addf %2, %4 : vector<32x128xf32>
    %6 = math.tanh %5 : vector<32x128xf32>
    %c0_5 = arith.constant 0 : index
    %c0_6 = arith.constant 0 : index
    %7 = vector.load %arg4[%c0_5, %c0_6] : memref<32x32xf32, #tpu.memory_space<vmem>>, vector<32x32xf32>
    %cst_7 = arith.constant dense<0.000000e+00> : vector<32x128xf32>
    %8 = tpu.matmul %7, %6, %cst_7 {dimension_numbers = #tpu.dot_dimension_numbers<[1], [0], [0], [1], [0, 0, 1, 1], [], []>} : vector<32x32xf32>, vector<32x128xf32>, vector<32x128xf32> -> vector<32x128xf32>
    %c0_8 = arith.constant 0 : index
    %c0_9 = arith.constant 0 : index
    %9 = vector.load %arg5[%c0_8, %c0_9] : memref<32x1xf32, #tpu.memory_space<vmem>>, vector<32x1xf32>
    %10 = vector.broadcast %9 : vector<32x1xf32> to vector<32x128xf32>
    %11 = arith.addf %8, %10 : vector<32x128xf32>
    %12 = math.tanh %11 : vector<32x128xf32>
    %c0_10 = arith.constant 0 : index
    %c0_11 = arith.constant 0 : index
    %13 = vector.load %arg6[%c0_10, %c0_11] : memref<8x32xf32, #tpu.memory_space<vmem>>, vector<8x32xf32>
    %cst_12 = arith.constant dense<0.000000e+00> : vector<8x128xf32>
    %14 = tpu.matmul %13, %12, %cst_12 {dimension_numbers = #tpu.dot_dimension_numbers<[1], [0], [0], [1], [0, 0, 1, 1], [], []>} : vector<8x32xf32>, vector<32x128xf32>, vector<8x128xf32> -> vector<8x128xf32>
    %c0_13 = arith.constant 0 : index
    %c0_14 = arith.constant 0 : index
    %15 = vector.load %arg7[%c0_13, %c0_14] : memref<8x1xf32, #tpu.memory_space<vmem>>, vector<8x1xf32>
    %16 = vector.broadcast %15 : vector<8x1xf32> to vector<8x128xf32>
    %17 = arith.addf %14, %16 : vector<8x128xf32>
    %c0_15 = arith.constant 0 : index
    %c0_16 = arith.constant 0 : index
    %18 = vector.load %arg8[%c0_15, %c0_16] : memref<8x128xf32, #tpu.memory_space<vmem>>, vector<8x128xf32>
    tpu.vector_store %arg8[%c0_15, %c0_16], %17 {strides = array<i32>} : memref<8x128xf32, #tpu.memory_space<vmem>>, vector<8x128xf32>,
    return
  }
  func.func @transform_0(%arg0: i32) -> (i32, i32) {
    %c0_i32 = arith.constant 0 : i32
    %c0_i32_0 = arith.constant 0 : i32
    return %c0_i32, %arg0 : i32, i32
  }
  func.func @transform_1(%arg0: i32) -> (i32, i32) {
    %c0_i32 = arith.constant 0 : i32
    %c0_i32_0 = arith.constant 0 : i32
    %c0_i32_1 = arith.constant 0 : i32
    return %c0_i32, %c0_i32_0 : i32, i32
  }
  func.func @transform_2(%arg0: i32) -> (i32, i32) {
    %c0_i32 = arith.constant 0 : i32
    %c0_i32_0 = arith.constant 0 : i32
    %c0_i32_1 = arith.constant 0 : i32
    return %c0_i32, %c0_i32_0 : i32, i32
  }
  func.func @transform_3(%arg0: i32) -> (i32, i32) {
    %c0_i32 = arith.constant 0 : i32
    %c0_i32_0 = arith.constant 0 : i32
    %c0_i32_1 = arith.constant 0 : i32
    return %c0_i32, %c0_i32_0 : i32, i32
  }
  func.func @transform_4(%arg0: i32) -> (i32, i32) {
    %c0_i32 = arith.constant 0 : i32
    %c0_i32_0 = arith.constant 0 : i32
    %c0_i32_1 = arith.constant 0 : i32
    return %c0_i32, %c0_i32_0 : i32, i32
  }
  func.func @transform_5(%arg0: i32) -> (i32, i32) {
    %c0_i32 = arith.constant 0 : i32
    %c0_i32_0 = arith.constant 0 : i32
    %c0_i32_1 = arith.constant 0 : i32
    return %c0_i32, %c0_i32_0 : i32, i32
  }
  func.func @transform_6(%arg0: i32) -> (i32, i32) {
    %c0_i32 = arith.constant 0 : i32
    %c0_i32_0 = arith.constant 0 : i32
    %c0_i32_1 = arith.constant 0 : i32
    return %c0_i32, %c0_i32_0 : i32, i32
  }
  func.func @transform_7(%arg0: i32) -> (i32, i32) {
    %c0_i32 = arith.constant 0 : i32
    %c0_i32_0 = arith.constant 0 : i32
    return %c0_i32, %arg0 : i32, i32
  }
}

</mosaic_0001>

<llo_original>
// kernel: critic_forward.1
$region0: #{critic_forward.1}
  #allocation0 [shape = 'u32[]', space=smem, size = 0x4, offset = 0x4, fixed_abs, tag = 'smem constant byte address 0x4 - core index']
  #allocation1 [shape = 'u32[144,128]{1,0:T(1,128)}', space=vmem, size = 0x12000, scoped, tag = 'internal scratch']
  %s0 = inlined_call_operand.vmem [shape: f32[16,128], index: 0, kind: input, shape index: {}]
  %s1 = inlined_call_operand.vmem [shape: f32[32,16], index: 1, kind: input, shape index: {}]
  %s2 = inlined_call_operand.vmem [shape: f32[32,1], index: 2, kind: input, shape index: {}]
  %s3 = inlined_call_operand.vmem [shape: f32[32,32], index: 3, kind: input, shape index: {}]
  %s4 = inlined_call_operand.vmem [shape: f32[32,1], index: 4, kind: input, shape index: {}]
  %s5 = inlined_call_operand.vmem [shape: f32[8,32], index: 5, kind: input, shape index: {}]
  %s6 = inlined_call_operand.vmem [shape: f32[8,1], index: 6, kind: input, shape index: {}]
  %s7 = inlined_call_operand.vmem [shape: f32[8,128], index: 7, kind: output, shape index: {}]
  %s8 = sld [smem:[#allocation0]]
  $region38: #{critic_forward.1} parent=0
    _
  %s10 = ssub.s32 1, %s8
  %s11 = scalar_select 0, %s10, %s8
  // Predicated region
  $region2: #{critic_forward.1} parent=0 // pred_check
    _
  $region3: #{critic_forward.1} parent=0 // pred_check_branch
    %13 = sbr.rel (0) target = $region5
  $region4: #{critic_forward.1} parent=0 // pred_region
    _
  $region5: #{critic_forward.1} parent=0 // pred_fallthru
    _
  // Predicated region
  $region6: #{critic_forward.1} parent=0 // pred_check
    _
  $region7: #{critic_forward.1} parent=0 // pred_check_branch
    %15 = sbr.rel (0) target = $region9
  $region8: #{critic_forward.1} parent=0 // pred_region
    _
  $region9: #{critic_forward.1} parent=0 // pred_fallthru
    _
  // Predicated region
  $region10: #{critic_forward.1} parent=0 // pred_check
    _
  $region11: #{critic_forward.1} parent=0 // pred_check_branch
    %17 = sbr.rel (0) target = $region13
  $region12: #{critic_forward.1} parent=0 // pred_region
    _
  $region13: #{critic_forward.1} parent=0 // pred_fallthru
    _
  // Predicated region
  $region14: #{critic_forward.1} parent=0 // pred_check
    _
  $region15: #{critic_forward.1} parent=0 // pred_check_branch
    %19 = sbr.rel (0) target = $region17
  $region16: #{critic_forward.1} parent=0 // pred_region
    _
  $region17: #{critic_forward.1} parent=0 // pred_fallthru
    _
  // Predicated region
  $region18: #{critic_forward.1} parent=0 // pred_check
    _
  $region19: #{critic_forward.1} parent=0 // pred_check_branch
    %21 = sbr.rel (0) target = $region21
  $region20: #{critic_forward.1} parent=0 // pred_region
    _
  $region21: #{critic_forward.1} parent=0 // pred_fallthru
    _
  // Predicated region
  $region22: #{critic_forward.1} parent=0 // pred_check
    _
  $region23: #{critic_forward.1} parent=0 // pred_check_branch
    %23 = sbr.rel (0) target = $region25
  $region24: #{critic_forward.1} parent=0 // pred_region
    _
  $region25: #{critic_forward.1} parent=0 // pred_fallthru
    _
  // Predicated region
  $region26: #{critic_forward.1} parent=0 // pred_check
    _
  $region27: #{critic_forward.1} parent=0 // pred_check_branch
    %25 = sbr.rel (0) target = $region29
  $region28: #{critic_forward.1} parent=0 // pred_region
    _
  $region29: #{critic_forward.1} parent=0 // pred_fallthru
    _
  %v26 = vld [vmem:[%s0] sm:$0xff]
  %v27 = vld [vmem:[%s0 + $0x8] sm:$0xff]
  %v28 = vld [vmem:[%s1] sm:$0xff]
  %v29 = vld [vmem:[%s1 + $0x8] sm:$0xff]
  %v30 = vld [vmem:[%s1 + $0x10] sm:$0xff]
  %v31 = vld [vmem:[%s1 + $0x18] sm:$0xff]
  %v32 = vld [vmem:[%s2] sm:$0xff]
  %v33 = vld [vmem:[%s2 + $0x8] sm:$0xff]
  %v34 = vld [vmem:[%s2 + $0x10] sm:$0xff]
  %v35 = vld [vmem:[%s2 + $0x18] sm:$0xff]
  %37 = vset.pattern.permute.xlu0 0
  %38 = vperm.xlu0 %37, %v32
  %v39 = vpop.permute.xlu0 %38
  %42 = vset.pattern.permute.xlu0 0
  %43 = vperm.xlu0 %42, %v33
  %v44 = vpop.permute.xlu0 %43
  %47 = vset.pattern.permute.xlu0 0
  %48 = vperm.xlu0 %47, %v34
  %v49 = vpop.permute.xlu0 %48
  %52 = vset.pattern.permute.xlu0 0
  %53 = vperm.xlu0 %52, %v35
  %v54 = vpop.permute.xlu0 %53
  %vm56 = vcmask 130048
  %v58 = vsel %vm56, %v28, 0
  %v61 = vsel %vm56, %v29, 0
  %v64 = vsel %vm56, %v30, 0
  %v67 = vsel %vm56, %v31, 0
  %69 = vmatprep.subr.mxu0 0.0
  %70 = vmatpush1.msra.mxu0 %v26
  %71 = vmatprep.subr.mxu0 0.0
  %72 = vmatpush1.msra.mxu0 %v27
  %73 = vmatprep.subr.mxu0 0.0
  %74 = vmatpush1.msra.mxu0 0.0
  %75 = vmatprep.subr.mxu0 0.0
  %76 = vmatpush1.msra.mxu0 0.0
  %77 = vmatprep.subr.mxu0 0.0
  %78 = vmatpush1.msra.mxu0 0.0
  %79 = vmatprep.subr.mxu0 0.0
  %80 = vmatpush1.msra.mxu0 0.0
  %81 = vmatprep.subr.mxu0 0.0
  %82 = vmatpush1.msra.mxu0 0.0
  %83 = vmatprep.subr.mxu0 0.0
  %84 = vmatpush1.msra.mxu0 0.0
  %85 = vmatprep.subr.mxu0 0.0
  %86 = vmatpush1.msra.mxu0 0.0
  %87 = vmatprep.subr.mxu0 0.0
  %88 = vmatpush1.msra.mxu0 0.0
  %89 = vmatprep.subr.mxu0 0.0
  %90 = vmatpush1.msra.mxu0 0.0
  %91 = vmatprep.subr.mxu0 0.0
  %92 = vmatpush1.msra.mxu0 0.0
  %93 = vmatprep.subr.mxu0 0.0
  %94 = vmatpush1.msra.mxu0 0.0
  %95 = vmatprep.subr.mxu0 0.0
  %96 = vmatpush1.msra.mxu0 0.0
  %97 = vmatprep.subr.mxu0 0.0
  %98 = vmatpush1.msra.mxu0 0.0
  %99 = vmatprep.subr.mxu0 0.0
  %100 = vmatpush1.msra.mxu0 0.0
  %101 = vmatprep.subr.mxu0 0.0
  %102 = vmatpush1.msra.mxu0 0.0
  %103 = vmatprep.subr.mxu0 0.0
  %104 = vmatpush1.msra.mxu0 0.0
  %105 = vmatprep.subr.mxu0 0.0
  %106 = vmatpush1.msra.mxu0 0.0
  %107 = vmatprep.subr.mxu0 0.0
  %108 = vmatpush1.msra.mxu0 0.0
  %109 = vmatprep.subr.mxu0 0.0
  %110 = vmatpush1.msra.mxu0 0.0
  %111 = vmatprep.subr.mxu0 0.0
  %112 = vmatpush1.msra.mxu0 0.0
  %113 = vmatprep.subr.mxu0 0.0
  %114 = vmatpush1.msra.mxu0 0.0
  %115 = vmatprep.subr.mxu0 0.0
  %116 = vmatpush1.msra.mxu0 0.0
  %117 = vmatprep.subr.mxu0 0.0
  %118 = vmatpush1.msra.mxu0 0.0
  %119 = vmatprep.subr.mxu0 0.0
  %120 = vmatpush1.msra.mxu0 0.0
  %121 = vmatprep.subr.mxu0 0.0
  %122 = vmatpush1.msra.mxu0 0.0
  %123 = vmatprep.subr.mxu0 0.0
  %124 = vmatpush1.msra.mxu0 0.0
  %125 = vmatprep.subr.mxu0 0.0
  %126 = vmatpush1.msra.mxu0 0.0
  %127 = vmatprep.subr.mxu0 0.0
  %128 = vmatpush1.msra.mxu0 0.0
  %129 = vmatprep.subr.mxu0 0.0
  %130 = vmatpush1.msra.mxu0 0.0
  %131 = vmatprep.subr.mxu0 0.0
  %132 = vmatpush1.msra.mxu0 0.0
  %133 = vmatprep.mubr.f32.mxu0 0.0
  %134 = vmatmul.mubr.f32.gmra.mrb[0].mxu0 %v58
  %v135 = vpop.f32.mrb[0].mxu0
  %v136 = vadd.f32 %v39, %v135
  %v137 = vpop.f32.mrb[0].mxu0
  %138 = vmatprep.mubr.f32.mxu0 0.0
  %139 = vmatmul.mubr.f32.gmra.mrb[0].mxu0 %v61
  %v140 = vpop.f32.mrb[0].mxu0
  %v141 = vadd.f32 %v44, %v140
  %v142 = vpop.f32.mrb[0].mxu0
  %143 = vmatprep.mubr.f32.mxu0 0.0
  %144 = vmatmul.mubr.f32.gmra.mrb[0].mxu0 %v64
  %v145 = vpop.f32.mrb[0].mxu0
  %v146 = vadd.f32 %v49, %v145
  %v147 = vpop.f32.mrb[0].mxu0
  %148 = vmatprep.mubr.f32.mxu0 0.0
  %149 = vmatmul.mubr.f32.gmra.mrb[0].mxu0 %v67
  %v150 = vpop.f32.mrb[0].mxu0
  %v151 = vadd.f32 %v54, %v150
  %v152 = vpop.f32.mrb[0].mxu0
  %153 = vdwg.mxu0
  %v154 = vtanh.pop %v136
  %v155 = vtanh.pop %v141
  %v156 = vtanh.pop %v146
  %v157 = vtanh.pop %v151
  %v158 = vld [vmem:[%s3] sm:$0xff]
  %v159 = vld [vmem:[%s3 + $0x8] sm:$0xff]
  %v160 = vld [vmem:[%s3 + $0x10] sm:$0xff]
  %v161 = vld [vmem:[%s3 + $0x18] sm:$0xff]
  %v162 = vld [vmem:[%s4] sm:$0xff]
  %v163 = vld [vmem:[%s4 + $0x8] sm:$0xff]
  %v164 = vld [vmem:[%s4 + $0x10] sm:$0xff]
  %v165 = vld [vmem:[%s4 + $0x18] sm:$0xff]
  %167 = vset.pattern.permute.xlu0 0
  %168 = vperm.xlu0 %167, %v162
  %v169 = vpop.permute.xlu0 %168
  %172 = vset.pattern.permute.xlu0 0
  %173 = vperm.xlu0 %172, %v163
  %v174 = vpop.permute.xlu0 %173
  %177 = vset.pattern.permute.xlu0 0
  %178 = vperm.xlu0 %177, %v164
  %v179 = vpop.permute.xlu0 %178
  %182 = vset.pattern.permute.xlu0 0
  %183 = vperm.xlu0 %182, %v165
  %v184 = vpop.permute.xlu0 %183
  %vm186 = vcmask 261120
  %v188 = vsel %vm186, %v158, 0
  %v191 = vsel %vm186, %v159, 0
  %v194 = vsel %vm186, %v160, 0
  %v197 = vsel %vm186, %v161, 0
  %199 = vmatprep.subr.mxu0 0.0
  %200 = vmatpush1.msra.mxu0 %v154
  %201 = vmatprep.subr.mxu0 0.0
  %202 = vmatpush1.msra.mxu0 %v155
  %203 = vmatprep.subr.mxu0 0.0
  %204 = vmatpush1.msra.mxu0 %v156
  %205 = vmatprep.subr.mxu0 0.0
  %206 = vmatpush1.msra.mxu0 %v157
  %207 = vmatprep.subr.mxu0 0.0
  %208 = vmatpush1.msra.mxu0 0.0
  %209 = vmatprep.subr.mxu0 0.0
  %210 = vmatpush1.msra.mxu0 0.0
  %211 = vmatprep.subr.mxu0 0.0
  %212 = vmatpush1.msra.mxu0 0.0
  %213 = vmatprep.subr.mxu0 0.0
  %214 = vmatpush1.msra.mxu0 0.0
  %215 = vmatprep.subr.mxu0 0.0
  %216 = vmatpush1.msra.mxu0 0.0
  %217 = vmatprep.subr.mxu0 0.0
  %218 = vmatpush1.msra.mxu0 0.0
  %219 = vmatprep.subr.mxu0 0.0
  %220 = vmatpush1.msra.mxu0 0.0
  %221 = vmatprep.subr.mxu0 0.0
  %222 = vmatpush1.msra.mxu0 0.0
  %223 = vmatprep.subr.mxu0 0.0
  %224 = vmatpush1.msra.mxu0 0.0
  %225 = vmatprep.subr.mxu0 0.0
  %226 = vmatpush1.msra.mxu0 0.0
  %227 = vmatprep.subr.mxu0 0.0
  %228 = vmatpush1.msra.mxu0 0.0
  %229 = vmatprep.subr.mxu0 0.0
  %230 = vmatpush1.msra.mxu0 0.0
  %231 = vmatprep.subr.mxu0 0.0
  %232 = vmatpush1.msra.mxu0 0.0
  %233 = vmatprep.subr.mxu0 0.0
  %234 = vmatpush1.msra.mxu0 0.0
  %235 = vmatprep.subr.mxu0 0.0
  %236 = vmatpush1.msra.mxu0 0.0
  %237 = vmatprep.subr.mxu0 0.0
  %238 = vmatpush1.msra.mxu0 0.0
  %239 = vmatprep.subr.mxu0 0.0
  %240 = vmatpush1.msra.mxu0 0.0
  %241 = vmatprep.subr.mxu0 0.0
  %242 = vmatpush1.msra.mxu0 0.0
  %243 = vmatprep.subr.mxu0 0.0
  %244 = vmatpush1.msra.mxu0 0.0
  %245 = vmatprep.subr.mxu0 0.0
  %246 = vmatpush1.msra.mxu0 0.0
  %247 = vmatprep.subr.mxu0 0.0
  %248 = vmatpush1.msra.mxu0 0.0
  %249 = vmatprep.subr.mxu0 0.0
  %250 = vmatpush1.msra.mxu0 0.0
  %251 = vmatprep.subr.mxu0 0.0
  %252 = vmatpush1.msra.mxu0 0.0
  %253 = vmatprep.subr.mxu0 0.0
  %254 = vmatpush1.msra.mxu0 0.0
  %255 = vmatprep.subr.mxu0 0.0
  %256 = vmatpush1.msra.mxu0 0.0
  %257 = vmatprep.subr.mxu0 0.0
  %258 = vmatpush1.msra.mxu0 0.0
  %259 = vmatprep.subr.mxu0 0.0
  %260 = vmatpush1.msra.mxu0 0.0
  %261 = vmatprep.subr.mxu0 0.0
  %262 = vmatpush1.msra.mxu0 0.0
  %263 = vmatprep.mubr.f32.mxu0 0.0
  %264 = vmatmul.mubr.f32.gmra.mrb[0].mxu0 %v188
  %v265 = vpop.f32.mrb[0].mxu0
  %v266 = vadd.f32 %v169, %v265
  %v267 = vpop.f32.mrb[0].mxu0
  %268 = vmatprep.mubr.f32.mxu0 0.0
  %269 = vmatmul.mubr.f32.gmra.mrb[0].mxu0 %v191
  %v270 = vpop.f32.mrb[0].mxu0
  %v271 = vadd.f32 %v174, %v270
  %v272 = vpop.f32.mrb[0].mxu0
  %273 = vmatprep.mubr.f32.mxu0 0.0
  %274 = vmatmul.mubr.f32.gmra.mrb[0].mxu0 %v194
  %v275 = vpop.f32.mrb[0].mxu0
  %v276 = vadd.f32 %v179, %v275
  %v277 = vpop.f32.mrb[0].mxu0
  %278 = vmatprep.mubr.f32.mxu0 0.0
  %279 = vmatmul.mubr.f32.gmra.mrb[0].mxu0 %v197
  %v280 = vpop.f32.mrb[0].mxu0
  %v281 = vadd.f32 %v184, %v280
  %v282 = vpop.f32.mrb[0].mxu0
  %283 = vdwg.mxu0
  %v284 = vtanh.pop %v266
  %v285 = vtanh.pop %v271
  %v286 = vtanh.pop %v276
  %v287 = vtanh.pop %v281
  %v288 = vld [vmem:[%s5] sm:$0xff]
  %v289 = vld [vmem:[%s6] sm:$0xff]
  %291 = vset.pattern.permute.xlu0 0
  %292 = vperm.xlu0 %291, %v289
  %v293 = vpop.permute.xlu0 %292
  %v296 = vsel %vm186, %v288, 0
  %298 = vmatprep.subr.mxu0 0.0
  %299 = vmatpush1.msra.mxu0 %v284
  %300 = vmatprep.subr.mxu0 0.0
  %301 = vmatpush1.msra.mxu0 %v285
  %302 = vmatprep.subr.mxu0 0.0
  %303 = vmatpush1.msra.mxu0 %v286
  %304 = vmatprep.subr.mxu0 0.0
  %305 = vmatpush1.msra.mxu0 %v287
  %306 = vmatprep.subr.mxu0 0.0
  %307 = vmatpush1.msra.mxu0 0.0
  %308 = vmatprep.subr.mxu0 0.0
  %309 = vmatpush1.msra.mxu0 0.0
  %310 = vmatprep.subr.mxu0 0.0
  %311 = vmatpush1.msra.mxu0 0.0
  %312 = vmatprep.subr.mxu0 0.0
  %313 = vmatpush1.msra.mxu0 0.0
  %314 = vmatprep.subr.mxu0 0.0
  %315 = vmatpush1.msra.mxu0 0.0
  %316 = vmatprep.subr.mxu0 0.0
  %317 = vmatpush1.msra.mxu0 0.0
  %318 = vmatprep.subr.mxu0 0.0
  %319 = vmatpush1.msra.mxu0 0.0
  %320 = vmatprep.subr.mxu0 0.0
  %321 = vmatpush1.msra.mxu0 0.0
  %322 = vmatprep.subr.mxu0 0.0
  %323 = vmatpush1.msra.mxu0 0.0
  %324 = vmatprep.subr.mxu0 0.0
  %325 = vmatpush1.msra.mxu0 0.0
  %326 = vmatprep.subr.mxu0 0.0
  %327 = vmatpush1.msra.mxu0 0.0
  %328 = vmatprep.subr.mxu0 0.0
  %329 = vmatpush1.msra.mxu0 0.0
  %330 = vmatprep.subr.mxu0 0.0
  %331 = vmatpush1.msra.mxu0 0.0
  %332 = vmatprep.subr.mxu0 0.0
  %333 = vmatpush1.msra.mxu0 0.0
  %334 = vmatprep.subr.mxu0 0.0
  %335 = vmatpush1.msra.mxu0 0.0
  %336 = vmatprep.subr.mxu0 0.0
  %337 = vmatpush1.msra.mxu0 0.0
  %338 = vmatprep.subr.mxu0 0.0
  %339 = vmatpush1.msra.mxu0 0.0
  %340 = vmatprep.subr.mxu0 0.0
  %341 = vmatpush1.msra.mxu0 0.0
  %342 = vmatprep.subr.mxu0 0.0
  %343 = vmatpush1.msra.mxu0 0.0
  %344 = vmatprep.subr.mxu0 0.0
  %345 = vmatpush1.msra.mxu0 0.0
  %346 = vmatprep.subr.mxu0 0.0
  %347 = vmatpush1.msra.mxu0 0.0
  %348 = vmatprep.subr.mxu0 0.0
  %349 = vmatpush1.msra.mxu0 0.0
  %350 = vmatprep.subr.mxu0 0.0
  %351 = vmatpush1.msra.mxu0 0.0
  %352 = vmatprep.subr.mxu0 0.0
  %353 = vmatpush1.msra.mxu0 0.0
  %354 = vmatprep.subr.mxu0 0.0
  %355 = vmatpush1.msra.mxu0 0.0
  %356 = vmatprep.subr.mxu0 0.0
  %357 = vmatpush1.msra.mxu0 0.0
  %358 = vmatprep.subr.mxu0 0.0
  %359 = vmatpush1.msra.mxu0 0.0
  %360 = vmatprep.subr.mxu0 0.0
  %361 = vmatpush1.msra.mxu0 0.0
  %362 = vmatprep.mubr.f32.mxu0 0.0
  %363 = vmatmul.mubr.f32.gmra.mrb[0].mxu0 %v296
  %v364 = vpop.f32.mrb[0].mxu0
  %v365 = vadd.f32 %v293, %v364
  %v366 = vpop.f32.mrb[0].mxu0
  %367 = vdwg.mxu0
  %368 = vst [vmem:[%s7] sm:$0xff] %v365
  // Predicated region
  $region30: #{critic_forward.1} parent=0 // pred_check
    _
  $region31: #{critic_forward.1} parent=0 // pred_check_branch
    %370 = sbr.rel (0) target = $region33
  $region32: #{critic_forward.1} parent=0 // pred_region
    _
  $region33: #{critic_forward.1} parent=0 // pred_fallthru
    _
  // Predicated region
  $region34: #{critic_forward.1} parent=0 // pred_check
    _
  $region35: #{critic_forward.1} parent=0 // pred_check_branch
    %372 = sbr.rel (0) target = $region37
  $region36: #{critic_forward.1} parent=0 // pred_region
    _
  $region37: #{critic_forward.1} parent=0 // pred_fallthru
    _

</llo_original>
